<compile_context>
chip_gen: v6e
topology: v6e:2x2x1
jax: 0.10.0
libtpu: 0.0.40
codegen_flags: <defaults>
</compile_context>

<pallas_src>
import jax
import jax.numpy as jnp
from jax.experimental import pallas as pl
from jax.experimental.pallas import tpu as pltpu


def _round_up(x, m):
    return ((x + m - 1) // m) * m


def _vmem_limit_bytes():
    """~3/4 of per-core VMEM; conservative fallback that is safe on v7x (64 MiB/TC)."""
    try:
        cap = pltpu.get_tpu_info().vmem_capacity_bytes
    except Exception:
        cap = 64 * 1024 * 1024
    return int(min(cap * 3 // 4, 100 * 1024 * 1024))


def _largest_divisor_tile(dim_padded, max_tile, step=128):
    """Largest multiple of `step` <= max_tile that divides dim_padded (dim itself if small)."""
    if dim_padded <= max_tile:
        return dim_padded
    t = (max_tile // step) * step
    while t > step:
        if dim_padded % t == 0:
            return t
        t -= step
    return step


def _apply_activation(y, negative_slope):
    if negative_slope is None:
        return y
    if negative_slope == 0.0:
        return jnp.maximum(y, 0.0)
    return jnp.where(y > 0, y, negative_slope * y)


def _make_fused_kernel(negative_slope):
    """Single K step: y = act(x @ Wt + b); no accumulator, no branches."""
    def kernel(x_ref, w_ref, b_ref, o_ref):
        y = jnp.dot(x_ref[...], w_ref[...], preferred_element_type=jnp.float32)
        y = _apply_activation(y + b_ref[...], negative_slope)
        o_ref[...] = y.astype(o_ref.dtype)
    return kernel


def _make_acc_kernel(negative_slope):
    """K-tiled path: accumulate straight into the resident f32 output block."""
    def kernel(x_ref, w_ref, b_ref, o_ref):
        k = pl.program_id(2)

        @pl.when(k == 0)
        def _init():
            o_ref[...] = jnp.zeros_like(o_ref)

        o_ref[...] += jnp.dot(x_ref[...], w_ref[...],
                              preferred_element_type=jnp.float32)

        @pl.when(k == pl.num_programs(2) - 1)
        def _finalize():
            o_ref[...] = _apply_activation(o_ref[...] + b_ref[...], negative_slope)
    return kernel


class PallasLinear:
    """Pallas TPU forward of the GAN `Linear` block: act(x @ W^T + b).

    weight: (dim_out, dim_in) f32 (PyTorch nn.Linear layout); bias: (dim_out,) f32.
    Weight is transposed/padded/cast to bf16 once here; bias stays f32.
    """

    def __init__(self, weight, bias, activation="relu", lrelu_val=0.2,
                 max_tm=512, max_tn=512, max_tk=2048):
        dim_out, dim_in = weight.shape
        assert bias.shape == (dim_out,)
        self.dim_in, self.dim_out = dim_in, dim_out
        self.Kp = _round_up(dim_in, 128)
        self.Np = _round_up(dim_out, 128)
        self.max_tm, self.max_tn, self.max_tk = max_tm, max_tn, max_tk

        # One-time layout work (free at init, saves an HBM pass every forward).
        w_t = weight.T.astype(jnp.bfloat16)                       # (K, N)
        self.w_t = jnp.pad(w_t, ((0, self.Kp - dim_in), (0, self.Np - dim_out)))
        b = bias.astype(jnp.float32).reshape(1, dim_out)
        self.b = jnp.pad(b, ((0, 0), (0, self.Np - dim_out)))

        if activation == "relu":
            self.negative_slope = 0.0
        elif activation == "lrelu":
            self.negative_slope = float(lrelu_val)
        else:
            self.negative_slope = None

        self.vmem_limit = _vmem_limit_bytes()

    def _tiles(self, B):
        # bf16 sublane packing -> keep the M block a multiple of 16.
        Mp = _round_up(max(B, 1), 16)
        if Mp <= self.max_tm:
            tm = Mp                                   # no phantom M tiles
        else:
            n_m = -(-Mp // self.max_tm)
            tm = _round_up(-(-Mp // n_m), 16)         # minimal-padding split of M
        Bp = _round_up(Mp, tm)

        tn = _largest_divisor_tile(self.Np, self.max_tn)
        tk = _largest_divisor_tile(self.Kp, self.max_tk)

        # Small batch: make sure a parallel axis has >=2 blocks (v7x has 2 TCs).
        if Bp == tm and tn == self.Np and self.Np >= 256 and (self.Np // 2) % 128 == 0:
            tn = self.Np // 2

        # VMEM fit: double-buffered bf16 inputs + resident f32 output + bias.
        budget = int(self.vmem_limit * 0.8)

        def working_set(tm_, tn_, tk_):
            return (2 * tm_ * tk_ * 2 + 2 * tk_ * tn_ * 2
                    + 2 * tm_ * tn_ * 4 + 2 * tn_ * 4)

        while (working_set(tm, tn, tk) > budget and tk > 128
               and (tk // 2) % 128 == 0 and self.Kp % (tk // 2) == 0):
            tk //= 2
        while (working_set(tm, tn, tk) > budget and tn > 128
               and (tn // 2) % 128 == 0 and self.Np % (tn // 2) == 0):
            tn //= 2
        return tm, tn, tk, Bp

    def __call__(self, x):
        B, dim_in = x.shape
        assert dim_in == self.dim_in, (dim_in, self.dim_in)
        Kp, Np = self.Kp, self.Np
        tm, tn, tk, Bp = self._tiles(B)

        x_p = x.astype(jnp.bfloat16)
        if (Bp, Kp) != (B, dim_in):
            x_p = jnp.pad(x_p, ((0, Bp - B), (0, Kp - dim_in)))

        grid_m, grid_n, grid_k = Bp // tm, Np // tn, Kp // tk

        cost = pl.CostEstimate(
            flops=2 * Bp * Kp * Np,
            transcendentals=0,
            bytes_accessed=int(2 * (Bp * Kp + Kp * Np) + 4 * Np * (Bp + 1)),
        )

        if grid_k == 1:
            grid = (grid_m, grid_n)
            in_specs = [
                pl.BlockSpec((tm, tk), lambda i, j: (i, 0)),    # x tile   (bf16)
                pl.BlockSpec((tk, tn), lambda i, j: (0, j)),    # W^T tile (bf16)
                pl.BlockSpec((1, tn), lambda i, j: (0, j)),     # bias     (f32)
            ]
            out_spec = pl.BlockSpec((tm, tn), lambda i, j: (i, j))
            dims = ("parallel", "parallel")
            kernel = _make_fused_kernel(self.negative_slope)
        else:
            grid = (grid_m, grid_n, grid_k)
            in_specs = [
                pl.BlockSpec((tm, tk), lambda i, j, k: (i, k)),
                pl.BlockSpec((tk, tn), lambda i, j, k: (k, j)),
                pl.BlockSpec((1, tn), lambda i, j, k: (0, j)),
            ]
            out_spec = pl.BlockSpec((tm, tn), lambda i, j, k: (i, j))
            dims = ("parallel", "parallel", "arbitrary")
            kernel = _make_acc_kernel(self.negative_slope)

        out = pl.pallas_call(
            kernel,
            out_shape=jax.ShapeDtypeStruct((Bp, Np), jnp.float32),
            grid_spec=pltpu.PrefetchScalarGridSpec(
                num_scalar_prefetch=0,
                grid=grid,
                in_specs=in_specs,
                out_specs=out_spec,
            ),
            compiler_params=pltpu.CompilerParams(
                dimension_semantics=dims,
                vmem_limit_bytes=self.vmem_limit,
            ),
            cost_estimate=cost,
        )(x_p, self.w_t, self.b)

        if (Bp, Np) != (B, self.dim_out):
            out = out[:B, :self.dim_out]
        return out


if __name__ == "__main__":
    key = jax.random.PRNGKey(0)

    def torch_linear_init(k, dim_in, dim_out):
        kw, kb = jax.random.split(k)
        bound = 1.0 / (dim_in ** 0.5)
        w = jax.random.uniform(kw, (dim_out, dim_in), jnp.float32, -bound, bound)
        b = jax.random.uniform(kb, (dim_out,), jnp.float32, -bound, bound)
        return w, b

    def ref_forward(x, w, b, negative_slope):
        # Reference with operands rounded to bf16 (matches what the kernel streams)
        # but f32 math — the deliberate tolerance target after the bf16 switch.
        xq = x.astype(jnp.bfloat16).astype(jnp.float32)
        wq = w.astype(jnp.bfloat16).astype(jnp.float32)
        y = xq @ wq.T + b
        if negative_slope is None:
            return y
        if negative_slope == 0.0:
            return jnp.maximum(y, 0.0)
        return jnp.where(y > 0, y, negative_slope * y)

    k1, k2, k3, k4, k5, k6 = jax.random.split(key, 6)

    # --- 1) Small shapes, ReLU and LeakyReLU branches ------------------------
    B, DIN, DOUT = 8, 32, 64
    x = jax.random.normal(k1, (B, DIN), jnp.float32)
    w, b = torch_linear_init(k2, DIN, DOUT)

    lin = PallasLinear(w, b, activation="relu")
    out = jax.block_until_ready(lin(x))
    assert out.shape == (B, DOUT)
    assert jnp.allclose(out, ref_forward(x, w, b, 0.0), atol=1e-3, rtol=1e-3)
    # loose sanity check against pure-f32 math (bf16 operand rounding only)
    assert jnp.allclose(out, jnp.maximum(x @ w.T + b, 0.0), atol=5e-2, rtol=5e-2)

    lin_l = PallasLinear(w, b, activation="lrelu", lrelu_val=0.2)
    out_l = jax.block_until_ready(lin_l(x))
    assert jnp.allclose(out_l, ref_forward(x, w, b, 0.2), atol=1e-3, rtol=1e-3)

    # --- 2) Non-tile-aligned shapes: padding-minimizing tiles + 2 N blocks ----
    B2, DIN2, DOUT2 = 300, 320, 200
    x2 = jax.random.normal(k3, (B2, DIN2), jnp.float32)
    w2, b2 = torch_linear_init(k4, DIN2, DOUT2)
    lin2 = PallasLinear(w2, b2, activation="relu")
    out2 = jax.block_until_ready(lin2(x2))
    assert out2.shape == (B2, DOUT2)
    assert jnp.allclose(out2, ref_forward(x2, w2, b2, 0.0), atol=2e-3, rtol=2e-3)

    # --- 3) Force the K-tiled accumulation path (grid_k > 1) ------------------
    B3, DIN3, DOUT3 = 16, 256, 128
    x3 = jax.random.normal(k5, (B3, DIN3), jnp.float32)
    w3, b3 = torch_linear_init(k6, DIN3, DOUT3)
    lin3 = PallasLinear(w3, b3, activation="relu", max_tk=128)
    out3 = jax.block_until_ready(lin3(x3))
    assert out3.shape == (B3, DOUT3)
    assert jnp.allclose(out3, ref_forward(x3, w3, b3, 0.0), atol=2e-3, rtol=2e-3)

    print("KERNEL_OK")
</pallas_src>

<mosaic_0001>
module attributes {stable_mosaic.version = 11 : i64} {
  func.func @kernel(%arg0: i32, %arg1: i32, %arg2: memref<16x128xbf16, #tpu.memory_space<vmem>>, %arg3: memref<128x128xbf16, #tpu.memory_space<vmem>>, %arg4: memref<1x128xf32, #tpu.memory_space<vmem>>, %arg5: memref<16x128xf32, #tpu.memory_space<vmem>>) attributes {dimension_semantics = [#tpu.dimension_semantics<parallel>, #tpu.dimension_semantics<parallel>], iteration_bounds = array<i64: 1, 1>, scalar_prefetch = 0 : i64, scratch_operands = 0 : i64, tpu.core_type = #tpu.core_type<tc>, window_params = [{transform_indices = @transform_0, window_bounds = array<i64: 16, 128>}, {transform_indices = @transform_1, window_bounds = array<i64: 128, 128>}, {transform_indices = @transform_2, window_bounds = array<i64: 1, 128>}, {transform_indices = @transform_3, window_bounds = array<i64: 16, 128>}]} {
    %c0 = arith.constant 0 : index
    %c0_0 = arith.constant 0 : index
    %0 = vector.load %arg2[%c0, %c0_0] : memref<16x128xbf16, #tpu.memory_space<vmem>>, vector<16x128xbf16>
    %c0_1 = arith.constant 0 : index
    %c0_2 = arith.constant 0 : index
    %1 = vector.load %arg3[%c0_1, %c0_2] : memref<128x128xbf16, #tpu.memory_space<vmem>>, vector<128x128xbf16>
    %cst = arith.constant dense<0.000000e+00> : vector<16x128xf32>
    %2 = tpu.matmul %0, %1, %cst {dimension_numbers = #tpu.dot_dimension_numbers<[1], [0], [0], [1], [0, 0, 1, 1], [], []>} : vector<16x128xbf16>, vector<128x128xbf16>, vector<16x128xf32> -> vector<16x128xf32>
    %c0_3 = arith.constant 0 : index
    %c0_4 = arith.constant 0 : index
    %3 = vector.load %arg4[%c0_3, %c0_4] : memref<1x128xf32, #tpu.memory_space<vmem>>, vector<1x128xf32>
    %4 = vector.broadcast %3 : vector<1x128xf32> to vector<16x128xf32>
    %5 = arith.addf %2, %4 : vector<16x128xf32>
    %cst_5 = arith.constant 0.000000e+00 : f32
    %6 = vector.broadcast %cst_5 : f32 to vector<16x128xf32>
    %7 = arith.maximumf %5, %6 : vector<16x128xf32>
    %c0_6 = arith.constant 0 : index
    %c0_7 = arith.constant 0 : index
    %8 = vector.load %arg5[%c0_6, %c0_7] : memref<16x128xf32, #tpu.memory_space<vmem>>, vector<16x128xf32>
    tpu.vector_store %arg5[%c0_6, %c0_7], %7 {strides = array<i32>} : memref<16x128xf32, #tpu.memory_space<vmem>>, vector<16x128xf32>,
    return
  }
  func.func @transform_0(%arg0: i32, %arg1: i32) -> (i32, i32) {
    %c0_i32 = arith.constant 0 : i32
    %c0_i32_0 = arith.constant 0 : i32
    return %arg0, %c0_i32 : i32, i32
  }
  func.func @transform_1(%arg0: i32, %arg1: i32) -> (i32, i32) {
    %c0_i32 = arith.constant 0 : i32
    %c0_i32_0 = arith.constant 0 : i32
    return %c0_i32, %arg1 : i32, i32
  }
  func.func @transform_2(%arg0: i32, %arg1: i32) -> (i32, i32) {
    %c0_i32 = arith.constant 0 : i32
    %c0_i32_0 = arith.constant 0 : i32
    return %c0_i32, %arg1 : i32, i32
  }
  func.func @transform_3(%arg0: i32, %arg1: i32) -> (i32, i32) {
    %c0_i32 = arith.constant 0 : i32
    return %arg0, %arg1 : i32, i32
  }
}

</mosaic_0001>

<llo_original>
// kernel: tpu_custom_call.1
$region0: #{tpu_custom_call.1}
  #allocation0 [shape = 'u32[]', space=smem, size = 0x4, offset = 0x4, fixed_abs, tag = 'smem constant byte address 0x4 - core index']
  #allocation1 [shape = 'u32[144,128]{1,0:T(1,128)}', space=vmem, size = 0x12000, scoped, tag = 'internal scratch']
  %s0 = inlined_call_operand.hbm [shape: bf16[16,128], index: 0, kind: input, shape index: {}]
  %s1 = inlined_call_operand.hbm [shape: bf16[128,128], index: 1, kind: input, shape index: {}]
  %s2 = inlined_call_operand.vmem [shape: f32[1,128], index: 2, kind: input, shape index: {}]
  %s3 = inlined_call_operand.hbm [shape: f32[16,128], index: 3, kind: output, shape index: {}]
  %s4 = sld [smem:[#allocation0]]
  $region30: #{tpu_custom_call.1} parent=0
    _
  %s6 = ssub.s32 1, %s4
  %s7 = scalar_select 0, %s6, %s4
  $region1: #{tpu_custom_call.1} parent=0
    #allocation2 [shape = 'u8[4096]{0}', space=vmem, size = 0x1000, scoped, tag = 'input window, operand 0, single buffered']
    #allocation3 [shape = 's32[1]{0}', space=sflag, size = 0x4, scoped, tag = 'scoped memory for tpu_custom_call.1']
    #allocation4 [shape = 's32[1]{0}', space=sflag, size = 0x4, scoped, tag = 'scoped memory for tpu_custom_call.1']
    #allocation5 [shape = 'u8[32768]{0}', space=vmem, size = 0x8000, scoped, tag = 'input window, operand 1, single buffered']
    #allocation6 [shape = 's32[1]{0}', space=sflag, size = 0x4, scoped, tag = 'scoped memory for tpu_custom_call.1']
    #allocation7 [shape = 'u8[8192]{0}', space=vmem, size = 0x2000, scoped, tag = 'output window, operand 0, single buffered']
    %8 = vsyncpa [#allocation3], 0
    %9 = vsyncpa [#allocation6], 0
    %10 = vsyncpa [#allocation4], 0
    // Predicated region
    $region2: #{tpu_custom_call.1} parent=1 // pred_check
      _
    $region3: #{tpu_custom_call.1} parent=1 // pred_check_branch
      %12 = sbr.rel (0) target = $region5
    $region4: #{tpu_custom_call.1} parent=1 // pred_region
      %s14 = ssub.s32 128, 128
      %15 = vsyncadd [#allocation3], %s14
      %s16 = sshll.u32 [#allocation2], 4
      %s17 = int_to_ptr.vmem [resolvable:$true] %s16
      %22 = dma.hbm_to_vmem [thread:$0]  %s0, 128, %s17, [#allocation3], 64, 64, 4
    $region5: #{tpu_custom_call.1} parent=1 // pred_fallthru
      _
    // Predicated region
    $region6: #{tpu_custom_call.1} parent=1 // pred_check
      _
    $region7: #{tpu_custom_call.1} parent=1 // pred_check_branch
      %24 = sbr.rel (0) target = $region9
    $region8: #{tpu_custom_call.1} parent=1 // pred_region
      %s26 = ssub.s32 1024, 1024
      %27 = vsyncadd [#allocation6], %s26
      %s28 = sshll.u32 [#allocation5], 4
      %s29 = int_to_ptr.vmem [resolvable:$true] %s28
      %34 = dma.hbm_to_vmem [thread:$0]  %s1, 1024, %s29, [#allocation6], 64, 64, 4
    $region9: #{tpu_custom_call.1} parent=1 // pred_fallthru
      _
    // Predicated region
    $region10: #{tpu_custom_call.1} parent=1 // pred_check
      _
    $region11: #{tpu_custom_call.1} parent=1 // pred_check_branch
      %36 = sbr.rel (0) target = $region13
    $region12: #{tpu_custom_call.1} parent=1 // pred_region
      _
    $region13: #{tpu_custom_call.1} parent=1 // pred_fallthru
      _
    // Predicated region
    $region14: #{tpu_custom_call.1} parent=1 // pred_check
      _
    $region15: #{tpu_custom_call.1} parent=1 // pred_check_branch
      %38 = sbr.rel (0) target = $region17
    $region16: #{tpu_custom_call.1} parent=1 // pred_region
      %39 = dma.done [#allocation3], 128
    $region17: #{tpu_custom_call.1} parent=1 // pred_fallthru
      _
    // Predicated region
    $region18: #{tpu_custom_call.1} parent=1 // pred_check
      _
    $region19: #{tpu_custom_call.1} parent=1 // pred_check_branch
      %41 = sbr.rel (0) target = $region21
    $region20: #{tpu_custom_call.1} parent=1 // pred_region
      %42 = dma.done [#allocation6], 1024
    $region21: #{tpu_custom_call.1} parent=1 // pred_fallthru
      _
    %v44 = vld [vmem:[#allocation2] sm:$0xf]
    %v45 = vld [vmem:[#allocation2 + $0x4] sm:$0xf]
    %v46 = vld [vmem:[#allocation5] sm:$0xf]
    %v47 = vld [vmem:[#allocation5 + $0x4] sm:$0xf]
    %v48 = vld [vmem:[#allocation5 + $0x8] sm:$0xf]
    %v49 = vld [vmem:[#allocation5 + $0xc] sm:$0xf]
    %v50 = vld [vmem:[#allocation5 + $0x10] sm:$0xf]
    %v51 = vld [vmem:[#allocation5 + $0x14] sm:$0xf]
    %v52 = vld [vmem:[#allocation5 + $0x18] sm:$0xf]
    %v53 = vld [vmem:[#allocation5 + $0x1c] sm:$0xf]
    %v54 = vld [vmem:[#allocation5 + $0x20] sm:$0xf]
    %v55 = vld [vmem:[#allocation5 + $0x24] sm:$0xf]
    %v56 = vld [vmem:[#allocation5 + $0x28] sm:$0xf]
    %v57 = vld [vmem:[#allocation5 + $0x2c] sm:$0xf]
    %v58 = vld [vmem:[#allocation5 + $0x30] sm:$0xf]
    %v59 = vld [vmem:[#allocation5 + $0x34] sm:$0xf]
    %v60 = vld [vmem:[#allocation5 + $0x38] sm:$0xf]
    %v61 = vld [vmem:[#allocation5 + $0x3c] sm:$0xf]
    %v62 = vld [vmem:[%s2] sm:$0x1]
    %v64 = vlaneseq
    %v65 = vshrl.u32 %v64, 7
    %v66 = vsub.s32 0, %v65
    %v67 = vrot.slane %v62, %v66
    %v71 = vunpack.c.l.b16 %v44
    %v72 = vunpack.c.l.b16 %v45
    %v73 = vpack.c.b16 %v72, %v71
    %v91 = vunpack.c.l.b16 %v46
    %v92 = vunpack.c.l.b16 %v47
    %v93 = vunpack.c.l.b16 %v48
    %v94 = vunpack.c.l.b16 %v49
    %v95 = vunpack.c.l.b16 %v50
    %v96 = vunpack.c.l.b16 %v51
    %v97 = vunpack.c.l.b16 %v52
    %v98 = vunpack.c.l.b16 %v53
    %v99 = vunpack.c.l.b16 %v54
    %v100 = vunpack.c.l.b16 %v55
    %v101 = vunpack.c.l.b16 %v56
    %v102 = vunpack.c.l.b16 %v57
    %v103 = vunpack.c.l.b16 %v58
    %v104 = vunpack.c.l.b16 %v59
    %v105 = vunpack.c.l.b16 %v60
    %v106 = vunpack.c.l.b16 %v61
    %v107 = vpack.c.b16 %v92, %v91
    %v108 = vpack.c.b16 %v94, %v93
    %v109 = vpack.c.b16 %v96, %v95
    %v110 = vpack.c.b16 %v98, %v97
    %v111 = vpack.c.b16 %v100, %v99
    %v112 = vpack.c.b16 %v102, %v101
    %v113 = vpack.c.b16 %v104, %v103
    %v114 = vpack.c.b16 %v106, %v105
    %123 = vmatprep.subr.bf16.mxu0 0
    %124 = vmatpush1.bf16.msra.mxu0 %v114
    %125 = vmatprep.subr.bf16.mxu0 0
    %126 = vmatpush1.bf16.msra.mxu0 %v113
    %127 = vmatprep.subr.bf16.mxu0 0
    %128 = vmatpush1.bf16.msra.mxu0 %v112
    %129 = vmatprep.subr.bf16.mxu0 0
    %130 = vmatpush1.bf16.msra.mxu0 %v111
    %131 = vmatprep.subr.bf16.mxu0 0
    %132 = vmatpush1.bf16.msra.mxu0 %v110
    %133 = vmatprep.subr.bf16.mxu0 0
    %134 = vmatpush1.bf16.msra.mxu0 %v109
    %135 = vmatprep.subr.bf16.mxu0 0
    %136 = vmatpush1.bf16.msra.mxu0 %v108
    %137 = vmatprep.subr.bf16.mxu0 0
    %138 = vmatpush1.bf16.msra.mxu0 %v107
    %139 = vmatprep.subr.bf16.mxu0 0
    %140 = vmatpush2.bf16.msra.mxu0 0
    %141 = vmatprep.subr.bf16.mxu0 0
    %142 = vmatpush2.bf16.msra.mxu0 0
    %143 = vmatprep.subr.bf16.mxu0 0
    %144 = vmatpush2.bf16.msra.mxu0 0
    %145 = vmatprep.subr.bf16.mxu0 0
    %146 = vmatpush2.bf16.msra.mxu0 0
    %147 = vmatprep.subr.bf16.mxu0 0
    %148 = vmatpush2.bf16.msra.mxu0 0
    %149 = vmatprep.subr.bf16.mxu0 0
    %150 = vmatpush2.bf16.msra.mxu0 0
    %151 = vmatprep.subr.bf16.mxu0 0
    %152 = vmatpush2.bf16.msra.mxu0 0
    %153 = vmatprep.subr.bf16.mxu0 0
    %154 = vmatpush2.bf16.msra.mxu0 0
    %155 = vmatprep.mubr.bf16.mxu0 0
    %156 = vmatmul.mubr.bf16.gmra.mxu0 %v73
    %v157 = vpop.f32.mrf.mxu0
    %v158 = vadd.f32 %v67, %v157
    %v159 = vpop.f32.mrf.mxu0
    %v160 = vpop.f32.mrf.mxu0
    %v161 = vadd.f32 %v67, %v160
    %v162 = vpop.f32.mrf.mxu0
    %163 = vdwg.mxu0
    %v164 = vmax.f32 %v158, 0.0
    %v165 = vmax.f32 %v161, 0.0
    %166 = vst [vmem:[#allocation7] sm:$0xff] %v164
    %167 = vst [vmem:[#allocation7 + $0x8] sm:$0xff] %v165
    // Predicated region
    $region22: #{tpu_custom_call.1} parent=1 // pred_check
      _
    $region23: #{tpu_custom_call.1} parent=1 // pred_check_branch
      %169 = sbr.rel (0) target = $region25
    $region24: #{tpu_custom_call.1} parent=1 // pred_region
      %s171 = ssub.s32 256, 256
      %172 = vsyncadd [#allocation4], %s171
      %s173 = sshll.u32 [#allocation7], 4
      %s174 = int_to_ptr.vmem [resolvable:$true] %s173
      %179 = dma.vmem_to_hbm [thread:$0]  %s174, 256, %s3, [#allocation4], 128, 128, 8
    $region25: #{tpu_custom_call.1} parent=1 // pred_fallthru
      _
    // Predicated region
    $region26: #{tpu_custom_call.1} parent=1 // pred_check
      _
    $region27: #{tpu_custom_call.1} parent=1 // pred_check_branch
      %181 = sbr.rel (0) target = $region29
    $region28: #{tpu_custom_call.1} parent=1 // pred_region
      %182 = dma.done [#allocation4], 256
    $region29: #{tpu_custom_call.1} parent=1 // pred_fallthru
      _
    %183 = vsyncpa [#allocation3], 1
    %184 = vsyncpa [#allocation6], 1
    %185 = vsyncpa [#allocation4], 1

</llo_original>
